<compile_context>
chip_gen: v7x
topology: tpu7x:2x2x1
jax: 0.10.0
libtpu: 0.0.40
codegen_flags: <defaults>
</compile_context>

<pallas_src>
import functools

import jax
import jax.numpy as jnp
from jax.experimental import pallas as pl
from jax.experimental.pallas import tpu as pltpu

H_IN = 2        # input features
H_HID = 50      # hidden units
HP = 56         # hidden padded to a multiple of 8 sublanes (was 64)
LANE = 128
CW = 512        # in-kernel column-chunk width (lanes)
MAX_TB = 16384  # max lanes per grid step


def mlp_kernel(x_ref, w1_ref, b1_ref, w2_ref, b2_ref, o_ref, *, n_chunks):
    # x_ref:  (2, TB)  features on sublanes, batch on lanes
    # w1_ref: (HP, 2)  b1_ref/w2_ref: (HP, 1)  b2_ref: (1, 1)
    # o_ref:  (1, TB)  lane-dense output
    b2 = b2_ref[...]                                        # (1, 1)

    @pl.loop(0, n_chunks)
    def _(c):
        col = pl.multiple_of(c * CW, CW)
        # Hoisted sublane broadcasts (JAX does not CSE broadcast_in_dim).
        x0 = jnp.broadcast_to(x_ref[0:1, pl.ds(col, CW)], (8, CW))
        x1 = jnp.broadcast_to(x_ref[1:2, pl.ds(col, CW)], (8, CW))
        acc = jnp.zeros((8, CW), jnp.float32)
        # Hidden axis in 8-sublane chunks: live set stays ~16 vregs, no
        # (HP, TB) slab -> no spill traffic on the vector-store slot.
        for hc in range(HP // 8):
            h0 = hc * 8
            w1c = w1_ref[h0:h0 + 8, :]                      # (8, 2)
            b1c = b1_ref[h0:h0 + 8, :]                      # (8, 1)
            w2c = w2_ref[h0:h0 + 8, :]                      # (8, 1)
            h = w1c[:, 0:1] * x0 + w1c[:, 1:2] * x1 + b1c   # (8, CW)  VPU
            h = jnp.maximum(h, 0.0)
            acc = acc + h * w2c
        # Layer 2 tail: sublane (XLU) reduce over the hidden axis.
        o = jnp.sum(acc, axis=0, keepdims=True) + b2        # (1, CW)
        o_ref[:, pl.ds(col, CW)] = o


def net_forward_lane_dense(x_t, w1, b1, w2, b2):
    """Lane-dense entry point: x_t (2, B) -> (1, B)."""
    B = x_t.shape[1]
    x_t = x_t.astype(jnp.float32)

    # Lane tile: big enough to amortize per-grid-step overhead, capped near
    # ceil(B/2) so B > CW still yields >= 2 "parallel" steps (v7x has 2 TCs).
    half = pl.cdiv(pl.cdiv(B, 2), CW) * CW
    tb = max(CW, min(MAX_TB, half))
    b_pad = pl.cdiv(B, tb) * tb
    grid = (b_pad // tb,)
    n_chunks = tb // CW

    if b_pad != B:  # pad fuses with the caller's transpose into one XLA pass
        x_t = jnp.zeros((2, b_pad), jnp.float32).at[:, :B].set(x_t)

    # Zero-pad hidden dim 50 -> 56 (padded rows contribute exactly 0).
    w1_p = jnp.zeros((HP, H_IN), jnp.float32).at[:H_HID, :].set(w1.astype(jnp.float32))
    b1_p = jnp.zeros((HP, 1), jnp.float32).at[:H_HID, 0].set(b1.astype(jnp.float32))
    w2_p = jnp.zeros((HP, 1), jnp.float32).at[:H_HID, 0].set(w2[0].astype(jnp.float32))
    b2_p = b2.reshape(1, 1).astype(jnp.float32)

    def const(shape):
        return pl.BlockSpec(shape, lambda i: (0,) * len(shape))

    out_pad = pl.pallas_call(
        functools.partial(mlp_kernel, n_chunks=n_chunks),
        out_shape=jax.ShapeDtypeStruct((1, b_pad), jnp.float32),
        grid=grid,
        in_specs=[
            pl.BlockSpec((2, tb), lambda i: (0, i)),   # x tile (batch on lanes)
            const((HP, H_IN)),                         # w1 (VMEM resident)
            const((HP, 1)),                            # b1
            const((HP, 1)),                            # w2
            const((1, 1)),                             # b2
        ],
        out_specs=pl.BlockSpec((1, tb), lambda i: (0, i)),
        compiler_params=pltpu.CompilerParams(
            dimension_semantics=("parallel",)),
    )(x_t, w1_p, b1_p, w2_p, b2_p)

    return out_pad if b_pad == B else out_pad[:, :B]


def net_forward(x, w1, b1, w2, b2):
    """Torch-layout entry: x (B, 2) -> (B, 1)."""
    B = x.shape[0]
    x_t = x.astype(jnp.float32).T                       # (2, B): batch on lanes
    out = net_forward_lane_dense(x_t, w1, b1, w2, b2)   # (1, B) lane-dense
    return out.reshape(B, 1)                            # metadata-only reshape


def init_params(key):
    """Deterministic init matching nn.Linear shapes (Kaiming-uniform-ish bounds)."""
    k1, k2, k3, k4 = jax.random.split(key, 4)
    bound1 = 1.0 / jnp.sqrt(2.0)   # fan_in = 2
    bound2 = 1.0 / jnp.sqrt(50.0)  # fan_in = 50
    w1 = jax.random.uniform(k1, (H_HID, H_IN), jnp.float32, -bound1, bound1)
    b1 = jax.random.uniform(k2, (H_HID,), jnp.float32, -bound1, bound1)
    w2 = jax.random.uniform(k3, (1, H_HID), jnp.float32, -bound2, bound2)
    b2 = jax.random.uniform(k4, (1,), jnp.float32, -bound2, bound2)
    return w1, b1, w2, b2


def _ref(x, w1, b1, w2, b2):
    return jnp.maximum(x @ w1.T + b1, 0.0) @ w2.T + b2


if __name__ == "__main__":
    key = jax.random.PRNGKey(0)
    kx, kx2, kx3, kp = jax.random.split(key, 4)
    w1, b1, w2, b2 = init_params(kp)

    # Small batch (single block, padded batch path).
    B = 8
    x = jax.random.normal(kx, (B, 2), jnp.float32)
    out = jax.block_until_ready(net_forward(x, w1, b1, w2, b2))
    ref = _ref(x, w1, b1, w2, b2)
    assert out.shape == (B, 1)
    assert jnp.allclose(out, ref, atol=1e-5, rtol=1e-5)

    # Larger, non-multiple batch (2-step grid + padding + multi-chunk loop).
    B2 = 2500
    x2 = jax.random.normal(kx2, (B2, 2), jnp.float32)
    out2 = jax.block_until_ready(net_forward(x2, w1, b1, w2, b2))
    ref2 = _ref(x2, w1, b1, w2, b2)
    assert out2.shape == (B2, 1)
    assert jnp.allclose(out2, ref2, atol=1e-5, rtol=1e-5)

    # Aligned batch (no-pad / no-slice fast path, 2-step grid).
    B3 = 4096
    x3 = jax.random.normal(kx3, (B3, 2), jnp.float32)
    out3 = jax.block_until_ready(net_forward(x3, w1, b1, w2, b2))
    ref3 = _ref(x3, w1, b1, w2, b2)
    assert out3.shape == (B3, 1)
    assert jnp.allclose(out3, ref3, atol=1e-5, rtol=1e-5)

    print("KERNEL_OK")
</pallas_src>

<mosaic_0001>
module attributes {stable_mosaic.version = 11 : i64} {
  func.func @mlp_kernel(%arg0: i32, %arg1: memref<2x512xf32, #tpu.memory_space<vmem>>, %arg2: memref<56x2xf32, #tpu.memory_space<vmem>>, %arg3: memref<56x1xf32, #tpu.memory_space<vmem>>, %arg4: memref<56x1xf32, #tpu.memory_space<vmem>>, %arg5: memref<1x1xf32, #tpu.memory_space<vmem>>, %arg6: memref<1x512xf32, #tpu.memory_space<vmem>>) attributes {dimension_semantics = [#tpu.dimension_semantics<parallel>], iteration_bounds = array<i64: 1>, scalar_prefetch = 0 : i64, scratch_operands = 0 : i64, tpu.core_type = #tpu.core_type<tc>, window_params = [{transform_indices = @transform_0, window_bounds = array<i64: 2, 512>}, {pipeline_mode = #tpu.pipeline_mode<synchronous>, transform_indices = @transform_1, window_bounds = array<i64: 56, 2>}, {pipeline_mode = #tpu.pipeline_mode<synchronous>, transform_indices = @transform_2, window_bounds = array<i64: 56, 1>}, {pipeline_mode = #tpu.pipeline_mode<synchronous>, transform_indices = @transform_3, window_bounds = array<i64: 56, 1>}, {pipeline_mode = #tpu.pipeline_mode<synchronous>, transform_indices = @transform_4, window_bounds = array<i64: 1, 1>}, {transform_indices = @transform_5, window_bounds = array<i64: 1, 512>}]} {
    %c0 = arith.constant 0 : index
    %c0_0 = arith.constant 0 : index
    %0 = vector.load %arg5[%c0, %c0_0] : memref<1x1xf32, #tpu.memory_space<vmem>>, vector<1x1xf32>
    %c0_i32 = arith.constant 0 : i32
    %c1_i32 = arith.constant 1 : i32
    %1 = arith.muli %c0_i32, %c1_i32 : i32
    %c0_i32_1 = arith.constant 0 : i32
    %2 = arith.addi %c0_i32_1, %1 : i32
    %c512_i32 = arith.constant 512 : i32
    %3 = arith.muli %2, %c512_i32 : i32
    %4 = tpu.assume_multiple %3, 512 : i32
    %c0_2 = arith.constant 0 : index
    %5 = arith.index_cast %4 : i32 to index
    %6 = vector.load %arg1[%c0_2, %5] : memref<2x512xf32, #tpu.memory_space<vmem>>, vector<1x512xf32>
    %7 = vector.shape_cast %6 : vector<1x512xf32> to vector<1x512xf32>
    %8 = vector.broadcast %7 : vector<1x512xf32> to vector<8x512xf32>
    %c1 = arith.constant 1 : index
    %9 = arith.index_cast %4 : i32 to index
    %10 = vector.load %arg1[%c1, %9] : memref<2x512xf32, #tpu.memory_space<vmem>>, vector<1x512xf32>
    %11 = vector.shape_cast %10 : vector<1x512xf32> to vector<1x512xf32>
    %12 = vector.broadcast %11 : vector<1x512xf32> to vector<8x512xf32>
    %cst = arith.constant 0.000000e+00 : f32
    %13 = vector.broadcast %cst : f32 to vector<8x512xf32>
    %c0_3 = arith.constant 0 : index
    %c0_4 = arith.constant 0 : index
    %14 = vector.load %arg2[%c0_3, %c0_4] : memref<56x2xf32, #tpu.memory_space<vmem>>, vector<8x2xf32>
    %c0_5 = arith.constant 0 : index
    %c0_6 = arith.constant 0 : index
    %15 = vector.load %arg3[%c0_5, %c0_6] : memref<56x1xf32, #tpu.memory_space<vmem>>, vector<8x1xf32>
    %c0_7 = arith.constant 0 : index
    %c0_8 = arith.constant 0 : index
    %16 = vector.load %arg4[%c0_7, %c0_8] : memref<56x1xf32, #tpu.memory_space<vmem>>, vector<8x1xf32>
    %17 = vector.extract_strided_slice %14 {offsets = [0, 0], sizes = [8, 1], strides = [1, 1]} : vector<8x2xf32> to vector<8x1xf32>
    %18 = vector.broadcast %17 : vector<8x1xf32> to vector<8x512xf32>
    %19 = arith.mulf %18, %8 : vector<8x512xf32>
    %20 = vector.extract_strided_slice %14 {offsets = [0, 1], sizes = [8, 1], strides = [1, 1]} : vector<8x2xf32> to vector<8x1xf32>
    %21 = vector.broadcast %20 : vector<8x1xf32> to vector<8x512xf32>
    %22 = arith.mulf %21, %12 : vector<8x512xf32>
    %23 = arith.addf %19, %22 : vector<8x512xf32>
    %24 = vector.broadcast %15 : vector<8x1xf32> to vector<8x512xf32>
    %25 = arith.addf %23, %24 : vector<8x512xf32>
    %cst_9 = arith.constant 0.000000e+00 : f32
    %26 = vector.broadcast %cst_9 : f32 to vector<8x512xf32>
    %27 = arith.maximumf %25, %26 : vector<8x512xf32>
    %28 = vector.broadcast %16 : vector<8x1xf32> to vector<8x512xf32>
    %29 = arith.mulf %27, %28 : vector<8x512xf32>
    %30 = arith.addf %13, %29 : vector<8x512xf32>
    %c8 = arith.constant 8 : index
    %c0_10 = arith.constant 0 : index
    %31 = vector.load %arg2[%c8, %c0_10] : memref<56x2xf32, #tpu.memory_space<vmem>>, vector<8x2xf32>
    %c8_11 = arith.constant 8 : index
    %c0_12 = arith.constant 0 : index
    %32 = vector.load %arg3[%c8_11, %c0_12] : memref<56x1xf32, #tpu.memory_space<vmem>>, vector<8x1xf32>
    %c8_13 = arith.constant 8 : index
    %c0_14 = arith.constant 0 : index
    %33 = vector.load %arg4[%c8_13, %c0_14] : memref<56x1xf32, #tpu.memory_space<vmem>>, vector<8x1xf32>
    %34 = vector.extract_strided_slice %31 {offsets = [0, 0], sizes = [8, 1], strides = [1, 1]} : vector<8x2xf32> to vector<8x1xf32>
    %35 = vector.broadcast %34 : vector<8x1xf32> to vector<8x512xf32>
    %36 = arith.mulf %35, %8 : vector<8x512xf32>
    %37 = vector.extract_strided_slice %31 {offsets = [0, 1], sizes = [8, 1], strides = [1, 1]} : vector<8x2xf32> to vector<8x1xf32>
    %38 = vector.broadcast %37 : vector<8x1xf32> to vector<8x512xf32>
    %39 = arith.mulf %38, %12 : vector<8x512xf32>
    %40 = arith.addf %36, %39 : vector<8x512xf32>
    %41 = vector.broadcast %32 : vector<8x1xf32> to vector<8x512xf32>
    %42 = arith.addf %40, %41 : vector<8x512xf32>
    %cst_15 = arith.constant 0.000000e+00 : f32
    %43 = vector.broadcast %cst_15 : f32 to vector<8x512xf32>
    %44 = arith.maximumf %42, %43 : vector<8x512xf32>
    %45 = vector.broadcast %33 : vector<8x1xf32> to vector<8x512xf32>
    %46 = arith.mulf %44, %45 : vector<8x512xf32>
    %47 = arith.addf %30, %46 : vector<8x512xf32>
    %c16 = arith.constant 16 : index
    %c0_16 = arith.constant 0 : index
    %48 = vector.load %arg2[%c16, %c0_16] : memref<56x2xf32, #tpu.memory_space<vmem>>, vector<8x2xf32>
    %c16_17 = arith.constant 16 : index
    %c0_18 = arith.constant 0 : index
    %49 = vector.load %arg3[%c16_17, %c0_18] : memref<56x1xf32, #tpu.memory_space<vmem>>, vector<8x1xf32>
    %c16_19 = arith.constant 16 : index
    %c0_20 = arith.constant 0 : index
    %50 = vector.load %arg4[%c16_19, %c0_20] : memref<56x1xf32, #tpu.memory_space<vmem>>, vector<8x1xf32>
    %51 = vector.extract_strided_slice %48 {offsets = [0, 0], sizes = [8, 1], strides = [1, 1]} : vector<8x2xf32> to vector<8x1xf32>
    %52 = vector.broadcast %51 : vector<8x1xf32> to vector<8x512xf32>
    %53 = arith.mulf %52, %8 : vector<8x512xf32>
    %54 = vector.extract_strided_slice %48 {offsets = [0, 1], sizes = [8, 1], strides = [1, 1]} : vector<8x2xf32> to vector<8x1xf32>
    %55 = vector.broadcast %54 : vector<8x1xf32> to vector<8x512xf32>
    %56 = arith.mulf %55, %12 : vector<8x512xf32>
    %57 = arith.addf %53, %56 : vector<8x512xf32>
    %58 = vector.broadcast %49 : vector<8x1xf32> to vector<8x512xf32>
    %59 = arith.addf %57, %58 : vector<8x512xf32>
    %cst_21 = arith.constant 0.000000e+00 : f32
    %60 = vector.broadcast %cst_21 : f32 to vector<8x512xf32>
    %61 = arith.maximumf %59, %60 : vector<8x512xf32>
    %62 = vector.broadcast %50 : vector<8x1xf32> to vector<8x512xf32>
    %63 = arith.mulf %61, %62 : vector<8x512xf32>
    %64 = arith.addf %47, %63 : vector<8x512xf32>
    %c24 = arith.constant 24 : index
    %c0_22 = arith.constant 0 : index
    %65 = vector.load %arg2[%c24, %c0_22] : memref<56x2xf32, #tpu.memory_space<vmem>>, vector<8x2xf32>
    %c24_23 = arith.constant 24 : index
    %c0_24 = arith.constant 0 : index
    %66 = vector.load %arg3[%c24_23, %c0_24] : memref<56x1xf32, #tpu.memory_space<vmem>>, vector<8x1xf32>
    %c24_25 = arith.constant 24 : index
    %c0_26 = arith.constant 0 : index
    %67 = vector.load %arg4[%c24_25, %c0_26] : memref<56x1xf32, #tpu.memory_space<vmem>>, vector<8x1xf32>
    %68 = vector.extract_strided_slice %65 {offsets = [0, 0], sizes = [8, 1], strides = [1, 1]} : vector<8x2xf32> to vector<8x1xf32>
    %69 = vector.broadcast %68 : vector<8x1xf32> to vector<8x512xf32>
    %70 = arith.mulf %69, %8 : vector<8x512xf32>
    %71 = vector.extract_strided_slice %65 {offsets = [0, 1], sizes = [8, 1], strides = [1, 1]} : vector<8x2xf32> to vector<8x1xf32>
    %72 = vector.broadcast %71 : vector<8x1xf32> to vector<8x512xf32>
    %73 = arith.mulf %72, %12 : vector<8x512xf32>
    %74 = arith.addf %70, %73 : vector<8x512xf32>
    %75 = vector.broadcast %66 : vector<8x1xf32> to vector<8x512xf32>
    %76 = arith.addf %74, %75 : vector<8x512xf32>
    %cst_27 = arith.constant 0.000000e+00 : f32
    %77 = vector.broadcast %cst_27 : f32 to vector<8x512xf32>
    %78 = arith.maximumf %76, %77 : vector<8x512xf32>
    %79 = vector.broadcast %67 : vector<8x1xf32> to vector<8x512xf32>
    %80 = arith.mulf %78, %79 : vector<8x512xf32>
    %81 = arith.addf %64, %80 : vector<8x512xf32>
    %c32 = arith.constant 32 : index
    %c0_28 = arith.constant 0 : index
    %82 = vector.load %arg2[%c32, %c0_28] : memref<56x2xf32, #tpu.memory_space<vmem>>, vector<8x2xf32>
    %c32_29 = arith.constant 32 : index
    %c0_30 = arith.constant 0 : index
    %83 = vector.load %arg3[%c32_29, %c0_30] : memref<56x1xf32, #tpu.memory_space<vmem>>, vector<8x1xf32>
    %c32_31 = arith.constant 32 : index
    %c0_32 = arith.constant 0 : index
    %84 = vector.load %arg4[%c32_31, %c0_32] : memref<56x1xf32, #tpu.memory_space<vmem>>, vector<8x1xf32>
    %85 = vector.extract_strided_slice %82 {offsets = [0, 0], sizes = [8, 1], strides = [1, 1]} : vector<8x2xf32> to vector<8x1xf32>
    %86 = vector.broadcast %85 : vector<8x1xf32> to vector<8x512xf32>
    %87 = arith.mulf %86, %8 : vector<8x512xf32>
    %88 = vector.extract_strided_slice %82 {offsets = [0, 1], sizes = [8, 1], strides = [1, 1]} : vector<8x2xf32> to vector<8x1xf32>
    %89 = vector.broadcast %88 : vector<8x1xf32> to vector<8x512xf32>
    %90 = arith.mulf %89, %12 : vector<8x512xf32>
    %91 = arith.addf %87, %90 : vector<8x512xf32>
    %92 = vector.broadcast %83 : vector<8x1xf32> to vector<8x512xf32>
    %93 = arith.addf %91, %92 : vector<8x512xf32>
    %cst_33 = arith.constant 0.000000e+00 : f32
    %94 = vector.broadcast %cst_33 : f32 to vector<8x512xf32>
    %95 = arith.maximumf %93, %94 : vector<8x512xf32>
    %96 = vector.broadcast %84 : vector<8x1xf32> to vector<8x512xf32>
    %97 = arith.mulf %95, %96 : vector<8x512xf32>
    %98 = arith.addf %81, %97 : vector<8x512xf32>
    %c40 = arith.constant 40 : index
    %c0_34 = arith.constant 0 : index
    %99 = vector.load %arg2[%c40, %c0_34] : memref<56x2xf32, #tpu.memory_space<vmem>>, vector<8x2xf32>
    %c40_35 = arith.constant 40 : index
    %c0_36 = arith.constant 0 : index
    %100 = vector.load %arg3[%c40_35, %c0_36] : memref<56x1xf32, #tpu.memory_space<vmem>>, vector<8x1xf32>
    %c40_37 = arith.constant 40 : index
    %c0_38 = arith.constant 0 : index
    %101 = vector.load %arg4[%c40_37, %c0_38] : memref<56x1xf32, #tpu.memory_space<vmem>>, vector<8x1xf32>
    %102 = vector.extract_strided_slice %99 {offsets = [0, 0], sizes = [8, 1], strides = [1, 1]} : vector<8x2xf32> to vector<8x1xf32>
    %103 = vector.broadcast %102 : vector<8x1xf32> to vector<8x512xf32>
    %104 = arith.mulf %103, %8 : vector<8x512xf32>
    %105 = vector.extract_strided_slice %99 {offsets = [0, 1], sizes = [8, 1], strides = [1, 1]} : vector<8x2xf32> to vector<8x1xf32>
    %106 = vector.broadcast %105 : vector<8x1xf32> to vector<8x512xf32>
    %107 = arith.mulf %106, %12 : vector<8x512xf32>
    %108 = arith.addf %104, %107 : vector<8x512xf32>
    %109 = vector.broadcast %100 : vector<8x1xf32> to vector<8x512xf32>
    %110 = arith.addf %108, %109 : vector<8x512xf32>
    %cst_39 = arith.constant 0.000000e+00 : f32
    %111 = vector.broadcast %cst_39 : f32 to vector<8x512xf32>
    %112 = arith.maximumf %110, %111 : vector<8x512xf32>
    %113 = vector.broadcast %101 : vector<8x1xf32> to vector<8x512xf32>
    %114 = arith.mulf %112, %113 : vector<8x512xf32>
    %115 = arith.addf %98, %114 : vector<8x512xf32>
    %c48 = arith.constant 48 : index
    %c0_40 = arith.constant 0 : index
    %116 = vector.load %arg2[%c48, %c0_40] : memref<56x2xf32, #tpu.memory_space<vmem>>, vector<8x2xf32>
    %c48_41 = arith.constant 48 : index
    %c0_42 = arith.constant 0 : index
    %117 = vector.load %arg3[%c48_41, %c0_42] : memref<56x1xf32, #tpu.memory_space<vmem>>, vector<8x1xf32>
    %c48_43 = arith.constant 48 : index
    %c0_44 = arith.constant 0 : index
    %118 = vector.load %arg4[%c48_43, %c0_44] : memref<56x1xf32, #tpu.memory_space<vmem>>, vector<8x1xf32>
    %119 = vector.extract_strided_slice %116 {offsets = [0, 0], sizes = [8, 1], strides = [1, 1]} : vector<8x2xf32> to vector<8x1xf32>
    %120 = vector.broadcast %119 : vector<8x1xf32> to vector<8x512xf32>
    %121 = arith.mulf %120, %8 : vector<8x512xf32>
    %122 = vector.extract_strided_slice %116 {offsets = [0, 1], sizes = [8, 1], strides = [1, 1]} : vector<8x2xf32> to vector<8x1xf32>
    %123 = vector.broadcast %122 : vector<8x1xf32> to vector<8x512xf32>
    %124 = arith.mulf %123, %12 : vector<8x512xf32>
    %125 = arith.addf %121, %124 : vector<8x512xf32>
    %126 = vector.broadcast %117 : vector<8x1xf32> to vector<8x512xf32>
    %127 = arith.addf %125, %126 : vector<8x512xf32>
    %cst_45 = arith.constant 0.000000e+00 : f32
    %128 = vector.broadcast %cst_45 : f32 to vector<8x512xf32>
    %129 = arith.maximumf %127, %128 : vector<8x512xf32>
    %130 = vector.broadcast %118 : vector<8x1xf32> to vector<8x512xf32>
    %131 = arith.mulf %129, %130 : vector<8x512xf32>
    %132 = arith.addf %115, %131 : vector<8x512xf32>
    %cst_46 = arith.constant dense<0.000000e+00> : vector<512xf32>
    %133 = vector.multi_reduction <add>, %132, %cst_46 [0] : vector<8x512xf32> to vector<512xf32>
    %134 = vector.shape_cast %133 : vector<512xf32> to vector<1x512xf32>
    %135 = vector.broadcast %0 : vector<1x1xf32> to vector<1x512xf32>
    %136 = arith.addf %134, %135 : vector<1x512xf32>
    %c0_47 = arith.constant 0 : index
    %137 = arith.index_cast %4 : i32 to index
    %138 = vector.load %arg6[%c0_47, %137] : memref<1x512xf32, #tpu.memory_space<vmem>>, vector<1x512xf32>
    tpu.vector_store %arg6[%c0_47, %137], %136 {strides = array<i32>} : memref<1x512xf32, #tpu.memory_space<vmem>>, vector<1x512xf32>,
    %c1_i32_48 = arith.constant 1 : i32
    return
  }
  func.func @transform_0(%arg0: i32) -> (i32, i32) {
    %c0_i32 = arith.constant 0 : i32
    %c0_i32_0 = arith.constant 0 : i32
    return %c0_i32, %arg0 : i32, i32
  }
  func.func @transform_1(%arg0: i32) -> (i32, i32) {
    %c0_i32 = arith.constant 0 : i32
    %c0_i32_0 = arith.constant 0 : i32
    %c0_i32_1 = arith.constant 0 : i32
    return %c0_i32, %c0_i32_0 : i32, i32
  }
  func.func @transform_2(%arg0: i32) -> (i32, i32) {
    %c0_i32 = arith.constant 0 : i32
    %c0_i32_0 = arith.constant 0 : i32
    %c0_i32_1 = arith.constant 0 : i32
    return %c0_i32, %c0_i32_0 : i32, i32
  }
  func.func @transform_3(%arg0: i32) -> (i32, i32) {
    %c0_i32 = arith.constant 0 : i32
    %c0_i32_0 = arith.constant 0 : i32
    %c0_i32_1 = arith.constant 0 : i32
    return %c0_i32, %c0_i32_0 : i32, i32
  }
  func.func @transform_4(%arg0: i32) -> (i32, i32) {
    %c0_i32 = arith.constant 0 : i32
    %c0_i32_0 = arith.constant 0 : i32
    %c0_i32_1 = arith.constant 0 : i32
    return %c0_i32, %c0_i32_0 : i32, i32
  }
  func.func @transform_5(%arg0: i32) -> (i32, i32) {
    %c0_i32 = arith.constant 0 : i32
    %c0_i32_0 = arith.constant 0 : i32
    return %c0_i32, %arg0 : i32, i32
  }
}

</mosaic_0001>

<llo_original>
// kernel: tpu_custom_call.1
$region0: #{tpu_custom_call.1}
  #allocation0 [shape = 'u32[]', space=smem, size = 0x4, offset = 0x4, fixed_abs, tag = 'smem constant byte address 0x4 - core index']
  #allocation1 [shape = 'u32[144,128]{1,0:T(1,128)}', space=vmem, size = 0x12000, scoped, tag = 'internal scratch']
  #allocation2 [shape = 'f32[1,1]{1,0:T(1,128)S(1)}', space=vmem, size = 0x200, scoped, tag = 'scoped memory for tpu_custom_call.1']
  %s0 = inlined_call_operand.vmem [shape: f32[2,512], index: 0, kind: input, shape index: {}]
  %s1 = inlined_call_operand.vmem [shape: f32[56,2], index: 1, kind: input, shape index: {}]
  %s2 = inlined_call_operand.vmem [shape: f32[56,1], index: 2, kind: input, shape index: {}]
  %s3 = inlined_call_operand.vmem [shape: f32[56,1], index: 3, kind: input, shape index: {}]
  %s4 = inlined_call_operand.<no memory space> [shape: f32[1,1], index: 4, kind: input, shape index: {}]
  %s5 = inlined_call_operand.hbm [shape: f32[1,512], index: 5, kind: output, shape index: {}]
  %s6 = sld [smem:[#allocation0]]
  $region30: #{tpu_custom_call.1} parent=0
    _
  %s8 = ssub.s32 1, %s6
  %s9 = scalar_select 0, %s8, %s6
  %v10 = vstv %s4
  %11 = vst [vmem:[#allocation2] sm:$0x1] %v10
  $region1: #{tpu_custom_call.1} parent=0
    #allocation3 [shape = 'u8[2048]{0}', space=vmem, size = 0x800, scoped, tag = 'output window, operand 0, single buffered']
    #allocation4 [shape = 's32[1]{0}', space=sflag, size = 0x4, scoped, tag = 'scoped memory for tpu_custom_call.1']
    %12 = vsyncpa [#allocation4], 0
    // Predicated region
    $region2: #{tpu_custom_call.1} parent=1 // pred_check
      _
    $region3: #{tpu_custom_call.1} parent=1 // pred_check_branch
      %14 = sbr.rel (0) target = $region5
    $region4: #{tpu_custom_call.1} parent=1 // pred_region
      _
    $region5: #{tpu_custom_call.1} parent=1 // pred_fallthru
      _
    // Predicated region
    $region6: #{tpu_custom_call.1} parent=1 // pred_check
      _
    $region7: #{tpu_custom_call.1} parent=1 // pred_check_branch
      %16 = sbr.rel (0) target = $region9
    $region8: #{tpu_custom_call.1} parent=1 // pred_region
      _
    $region9: #{tpu_custom_call.1} parent=1 // pred_fallthru
      _
    // Predicated region
    $region10: #{tpu_custom_call.1} parent=1 // pred_check
      _
    $region11: #{tpu_custom_call.1} parent=1 // pred_check_branch
      %18 = sbr.rel (0) target = $region13
    $region12: #{tpu_custom_call.1} parent=1 // pred_region
      _
    $region13: #{tpu_custom_call.1} parent=1 // pred_fallthru
      _
    // Predicated region
    $region14: #{tpu_custom_call.1} parent=1 // pred_check
      _
    $region15: #{tpu_custom_call.1} parent=1 // pred_check_branch
      %20 = sbr.rel (0) target = $region17
    $region16: #{tpu_custom_call.1} parent=1 // pred_region
      _
    $region17: #{tpu_custom_call.1} parent=1 // pred_fallthru
      _
    // Predicated region
    $region18: #{tpu_custom_call.1} parent=1 // pred_check
      _
    $region19: #{tpu_custom_call.1} parent=1 // pred_check_branch
      %22 = sbr.rel (0) target = $region21
    $region20: #{tpu_custom_call.1} parent=1 // pred_region
      _
    $region21: #{tpu_custom_call.1} parent=1 // pred_fallthru
      _
    %v23 = vld [vmem:[#allocation2] sm:$0x1]
    %v24 = vld [vmem:[%s0] ss:$2 sm:$0xf]
    %v26 = vlaneseq
    %v27 = vshrl.u32 %v26, 7
    %v28 = vsub.s32 0, %v27
    %v29 = vrot.slane %v24, %v28
    %v30 = vlaneseq
    %v31 = vshrl.u32 %v30, 7
    %v32 = vsub.s32 1, %v31
    %v33 = vrot.slane %v24, %v32
    %v34 = vlaneseq
    %v35 = vshrl.u32 %v34, 7
    %v36 = vsub.s32 2, %v35
    %v37 = vrot.slane %v24, %v36
    %v38 = vlaneseq
    %v39 = vshrl.u32 %v38, 7
    %v40 = vsub.s32 3, %v39
    %v41 = vrot.slane %v24, %v40
    %s46 = scalar_lea.vmem %s0, 1
    %v47 = vld [vmem:[%s46] ss:$2 sm:$0xf]
    %v49 = vlaneseq
    %v50 = vshrl.u32 %v49, 7
    %v51 = vsub.s32 0, %v50
    %v52 = vrot.slane %v47, %v51
    %v53 = vlaneseq
    %v54 = vshrl.u32 %v53, 7
    %v55 = vsub.s32 1, %v54
    %v56 = vrot.slane %v47, %v55
    %v57 = vlaneseq
    %v58 = vshrl.u32 %v57, 7
    %v59 = vsub.s32 2, %v58
    %v60 = vrot.slane %v47, %v59
    %v61 = vlaneseq
    %v62 = vshrl.u32 %v61, 7
    %v63 = vsub.s32 3, %v62
    %v64 = vrot.slane %v47, %v63
    %v69 = vld [vmem:[%s1] sm:$0xff]
    %v70 = vld [vmem:[%s2] sm:$0xff]
    %v71 = vld [vmem:[%s3] sm:$0xff]
    %73 = vset.pattern.permute.xlu0 0
    %74 = vperm.xlu0 %73, %v69
    %v75 = vpop.permute.xlu0 %74
    %v77 = vmul.f32 %v75, %v29
    %v78 = vmul.f32 %v75, %v33
    %v79 = vmul.f32 %v75, %v37
    %v80 = vmul.f32 %v75, %v41
    %81 = vset.pattern.permute.xlu0 1
    %82 = vperm.xlu0 %81, %v69
    %v83 = vpop.permute.xlu0 %82
    %v85 = vmul.f32 %v83, %v52
    %v86 = vmul.f32 %v83, %v56
    %v87 = vmul.f32 %v83, %v60
    %v88 = vmul.f32 %v83, %v64
    %v89 = vadd.f32 %v77, %v85
    %v90 = vadd.f32 %v78, %v86
    %v91 = vadd.f32 %v79, %v87
    %v92 = vadd.f32 %v80, %v88
    %94 = vset.pattern.permute.xlu0 0
    %95 = vperm.xlu0 %94, %v70
    %v96 = vpop.permute.xlu0 %95
    %v98 = vadd.f32 %v89, %v96
    %v99 = vadd.f32 %v90, %v96
    %v100 = vadd.f32 %v91, %v96
    %v101 = vadd.f32 %v92, %v96
    %v102 = vmax.f32 %v98, 0.0
    %v103 = vmax.f32 %v99, 0.0
    %v104 = vmax.f32 %v100, 0.0
    %v105 = vmax.f32 %v101, 0.0
    %107 = vset.pattern.permute.xlu0 0
    %108 = vperm.xlu0 %107, %v71
    %v109 = vpop.permute.xlu0 %108
    %v111 = vmul.f32 %v102, %v109
    %v112 = vmul.f32 %v103, %v109
    %v113 = vmul.f32 %v104, %v109
    %v114 = vmul.f32 %v105, %v109
    %v115 = vadd.f32 %v111, 0.0
    %v116 = vadd.f32 %v112, 0.0
    %v117 = vadd.f32 %v113, 0.0
    %v118 = vadd.f32 %v114, 0.0
    %v119 = vld [vmem:[%s1 + $0x8] sm:$0xff]
    %v120 = vld [vmem:[%s2 + $0x8] sm:$0xff]
    %v121 = vld [vmem:[%s3 + $0x8] sm:$0xff]
    %123 = vset.pattern.permute.xlu0 0
    %124 = vperm.xlu0 %123, %v119
    %v125 = vpop.permute.xlu0 %124
    %v127 = vmul.f32 %v125, %v29
    %v128 = vmul.f32 %v125, %v33
    %v129 = vmul.f32 %v125, %v37
    %v130 = vmul.f32 %v125, %v41
    %131 = vset.pattern.permute.xlu0 1
    %132 = vperm.xlu0 %131, %v119
    %v133 = vpop.permute.xlu0 %132
    %v135 = vmul.f32 %v133, %v52
    %v136 = vmul.f32 %v133, %v56
    %v137 = vmul.f32 %v133, %v60
    %v138 = vmul.f32 %v133, %v64
    %v139 = vadd.f32 %v127, %v135
    %v140 = vadd.f32 %v128, %v136
    %v141 = vadd.f32 %v129, %v137
    %v142 = vadd.f32 %v130, %v138
    %144 = vset.pattern.permute.xlu0 0
    %145 = vperm.xlu0 %144, %v120
    %v146 = vpop.permute.xlu0 %145
    %v148 = vadd.f32 %v139, %v146
    %v149 = vadd.f32 %v140, %v146
    %v150 = vadd.f32 %v141, %v146
    %v151 = vadd.f32 %v142, %v146
    %v152 = vmax.f32 %v148, 0.0
    %v153 = vmax.f32 %v149, 0.0
    %v154 = vmax.f32 %v150, 0.0
    %v155 = vmax.f32 %v151, 0.0
    %157 = vset.pattern.permute.xlu0 0
    %158 = vperm.xlu0 %157, %v121
    %v159 = vpop.permute.xlu0 %158
    %v161 = vmul.f32 %v152, %v159
    %v162 = vmul.f32 %v153, %v159
    %v163 = vmul.f32 %v154, %v159
    %v164 = vmul.f32 %v155, %v159
    %v165 = vadd.f32 %v115, %v161
    %v166 = vadd.f32 %v116, %v162
    %v167 = vadd.f32 %v117, %v163
    %v168 = vadd.f32 %v118, %v164
    %v169 = vld [vmem:[%s1 + $0x10] sm:$0xff]
    %v170 = vld [vmem:[%s2 + $0x10] sm:$0xff]
    %v171 = vld [vmem:[%s3 + $0x10] sm:$0xff]
    %173 = vset.pattern.permute.xlu0 0
    %174 = vperm.xlu0 %173, %v169
    %v175 = vpop.permute.xlu0 %174
    %v177 = vmul.f32 %v175, %v29
    %v178 = vmul.f32 %v175, %v33
    %v179 = vmul.f32 %v175, %v37
    %v180 = vmul.f32 %v175, %v41
    %181 = vset.pattern.permute.xlu0 1
    %182 = vperm.xlu0 %181, %v169
    %v183 = vpop.permute.xlu0 %182
    %v185 = vmul.f32 %v183, %v52
    %v186 = vmul.f32 %v183, %v56
    %v187 = vmul.f32 %v183, %v60
    %v188 = vmul.f32 %v183, %v64
    %v189 = vadd.f32 %v177, %v185
    %v190 = vadd.f32 %v178, %v186
    %v191 = vadd.f32 %v179, %v187
    %v192 = vadd.f32 %v180, %v188
    %194 = vset.pattern.permute.xlu0 0
    %195 = vperm.xlu0 %194, %v170
    %v196 = vpop.permute.xlu0 %195
    %v198 = vadd.f32 %v189, %v196
    %v199 = vadd.f32 %v190, %v196
    %v200 = vadd.f32 %v191, %v196
    %v201 = vadd.f32 %v192, %v196
    %v202 = vmax.f32 %v198, 0.0
    %v203 = vmax.f32 %v199, 0.0
    %v204 = vmax.f32 %v200, 0.0
    %v205 = vmax.f32 %v201, 0.0
    %207 = vset.pattern.permute.xlu0 0
    %208 = vperm.xlu0 %207, %v171
    %v209 = vpop.permute.xlu0 %208
    %v211 = vmul.f32 %v202, %v209
    %v212 = vmul.f32 %v203, %v209
    %v213 = vmul.f32 %v204, %v209
    %v214 = vmul.f32 %v205, %v209
    %v215 = vadd.f32 %v165, %v211
    %v216 = vadd.f32 %v166, %v212
    %v217 = vadd.f32 %v167, %v213
    %v218 = vadd.f32 %v168, %v214
    %v219 = vld [vmem:[%s1 + $0x18] sm:$0xff]
    %v220 = vld [vmem:[%s2 + $0x18] sm:$0xff]
    %v221 = vld [vmem:[%s3 + $0x18] sm:$0xff]
    %223 = vset.pattern.permute.xlu0 0
    %224 = vperm.xlu0 %223, %v219
    %v225 = vpop.permute.xlu0 %224
    %v227 = vmul.f32 %v225, %v29
    %v228 = vmul.f32 %v225, %v33
    %v229 = vmul.f32 %v225, %v37
    %v230 = vmul.f32 %v225, %v41
    %231 = vset.pattern.permute.xlu0 1
    %232 = vperm.xlu0 %231, %v219
    %v233 = vpop.permute.xlu0 %232
    %v235 = vmul.f32 %v233, %v52
    %v236 = vmul.f32 %v233, %v56
    %v237 = vmul.f32 %v233, %v60
    %v238 = vmul.f32 %v233, %v64
    %v239 = vadd.f32 %v227, %v235
    %v240 = vadd.f32 %v228, %v236
    %v241 = vadd.f32 %v229, %v237
    %v242 = vadd.f32 %v230, %v238
    %244 = vset.pattern.permute.xlu0 0
    %245 = vperm.xlu0 %244, %v220
    %v246 = vpop.permute.xlu0 %245
    %v248 = vadd.f32 %v239, %v246
    %v249 = vadd.f32 %v240, %v246
    %v250 = vadd.f32 %v241, %v246
    %v251 = vadd.f32 %v242, %v246
    %v252 = vmax.f32 %v248, 0.0
    %v253 = vmax.f32 %v249, 0.0
    %v254 = vmax.f32 %v250, 0.0
    %v255 = vmax.f32 %v251, 0.0
    %257 = vset.pattern.permute.xlu0 0
    %258 = vperm.xlu0 %257, %v221
    %v259 = vpop.permute.xlu0 %258
    %v261 = vmul.f32 %v252, %v259
    %v262 = vmul.f32 %v253, %v259
    %v263 = vmul.f32 %v254, %v259
    %v264 = vmul.f32 %v255, %v259
    %v265 = vadd.f32 %v215, %v261
    %v266 = vadd.f32 %v216, %v262
    %v267 = vadd.f32 %v217, %v263
    %v268 = vadd.f32 %v218, %v264
    %v269 = vld [vmem:[%s1 + $0x20] sm:$0xff]
    %v270 = vld [vmem:[%s2 + $0x20] sm:$0xff]
    %v271 = vld [vmem:[%s3 + $0x20] sm:$0xff]
    %273 = vset.pattern.permute.xlu0 0
    %274 = vperm.xlu0 %273, %v269
    %v275 = vpop.permute.xlu0 %274
    %v277 = vmul.f32 %v275, %v29
    %v278 = vmul.f32 %v275, %v33
    %v279 = vmul.f32 %v275, %v37
    %v280 = vmul.f32 %v275, %v41
    %281 = vset.pattern.permute.xlu0 1
    %282 = vperm.xlu0 %281, %v269
    %v283 = vpop.permute.xlu0 %282
    %v285 = vmul.f32 %v283, %v52
    %v286 = vmul.f32 %v283, %v56
    %v287 = vmul.f32 %v283, %v60
    %v288 = vmul.f32 %v283, %v64
    %v289 = vadd.f32 %v277, %v285
    %v290 = vadd.f32 %v278, %v286
    %v291 = vadd.f32 %v279, %v287
    %v292 = vadd.f32 %v280, %v288
    %294 = vset.pattern.permute.xlu0 0
    %295 = vperm.xlu0 %294, %v270
    %v296 = vpop.permute.xlu0 %295
    %v298 = vadd.f32 %v289, %v296
    %v299 = vadd.f32 %v290, %v296
    %v300 = vadd.f32 %v291, %v296
    %v301 = vadd.f32 %v292, %v296
    %v302 = vmax.f32 %v298, 0.0
    %v303 = vmax.f32 %v299, 0.0
    %v304 = vmax.f32 %v300, 0.0
    %v305 = vmax.f32 %v301, 0.0
    %307 = vset.pattern.permute.xlu0 0
    %308 = vperm.xlu0 %307, %v271
    %v309 = vpop.permute.xlu0 %308
    %v311 = vmul.f32 %v302, %v309
    %v312 = vmul.f32 %v303, %v309
    %v313 = vmul.f32 %v304, %v309
    %v314 = vmul.f32 %v305, %v309
    %v315 = vadd.f32 %v265, %v311
    %v316 = vadd.f32 %v266, %v312
    %v317 = vadd.f32 %v267, %v313
    %v318 = vadd.f32 %v268, %v314
    %v319 = vld [vmem:[%s1 + $0x28] sm:$0xff]
    %v320 = vld [vmem:[%s2 + $0x28] sm:$0xff]
    %v321 = vld [vmem:[%s3 + $0x28] sm:$0xff]
    %323 = vset.pattern.permute.xlu0 0
    %324 = vperm.xlu0 %323, %v319
    %v325 = vpop.permute.xlu0 %324
    %v327 = vmul.f32 %v325, %v29
    %v328 = vmul.f32 %v325, %v33
    %v329 = vmul.f32 %v325, %v37
    %v330 = vmul.f32 %v325, %v41
    %331 = vset.pattern.permute.xlu0 1
    %332 = vperm.xlu0 %331, %v319
    %v333 = vpop.permute.xlu0 %332
    %v335 = vmul.f32 %v333, %v52
    %v336 = vmul.f32 %v333, %v56
    %v337 = vmul.f32 %v333, %v60
    %v338 = vmul.f32 %v333, %v64
    %v339 = vadd.f32 %v327, %v335
    %v340 = vadd.f32 %v328, %v336
    %v341 = vadd.f32 %v329, %v337
    %v342 = vadd.f32 %v330, %v338
    %344 = vset.pattern.permute.xlu0 0
    %345 = vperm.xlu0 %344, %v320
    %v346 = vpop.permute.xlu0 %345
    %v348 = vadd.f32 %v339, %v346
    %v349 = vadd.f32 %v340, %v346
    %v350 = vadd.f32 %v341, %v346
    %v351 = vadd.f32 %v342, %v346
    %v352 = vmax.f32 %v348, 0.0
    %v353 = vmax.f32 %v349, 0.0
    %v354 = vmax.f32 %v350, 0.0
    %v355 = vmax.f32 %v351, 0.0
    %357 = vset.pattern.permute.xlu0 0
    %358 = vperm.xlu0 %357, %v321
    %v359 = vpop.permute.xlu0 %358
    %v361 = vmul.f32 %v352, %v359
    %v362 = vmul.f32 %v353, %v359
    %v363 = vmul.f32 %v354, %v359
    %v364 = vmul.f32 %v355, %v359
    %v365 = vadd.f32 %v315, %v361
    %v366 = vadd.f32 %v316, %v362
    %v367 = vadd.f32 %v317, %v363
    %v368 = vadd.f32 %v318, %v364
    %v369 = vld [vmem:[%s1 + $0x30] sm:$0xff]
    %v370 = vld [vmem:[%s2 + $0x30] sm:$0xff]
    %v371 = vld [vmem:[%s3 + $0x30] sm:$0xff]
    %373 = vset.pattern.permute.xlu0 0
    %374 = vperm.xlu0 %373, %v369
    %v375 = vpop.permute.xlu0 %374
    %v377 = vmul.f32 %v375, %v29
    %v378 = vmul.f32 %v375, %v33
    %v379 = vmul.f32 %v375, %v37
    %v380 = vmul.f32 %v375, %v41
    %381 = vset.pattern.permute.xlu0 1
    %382 = vperm.xlu0 %381, %v369
    %v383 = vpop.permute.xlu0 %382
    %v385 = vmul.f32 %v383, %v52
    %v386 = vmul.f32 %v383, %v56
    %v387 = vmul.f32 %v383, %v60
    %v388 = vmul.f32 %v383, %v64
    %v389 = vadd.f32 %v377, %v385
    %v390 = vadd.f32 %v378, %v386
    %v391 = vadd.f32 %v379, %v387
    %v392 = vadd.f32 %v380, %v388
    %394 = vset.pattern.permute.xlu0 0
    %395 = vperm.xlu0 %394, %v370
    %v396 = vpop.permute.xlu0 %395
    %v398 = vadd.f32 %v389, %v396
    %v399 = vadd.f32 %v390, %v396
    %v400 = vadd.f32 %v391, %v396
    %v401 = vadd.f32 %v392, %v396
    %v402 = vmax.f32 %v398, 0.0
    %v403 = vmax.f32 %v399, 0.0
    %v404 = vmax.f32 %v400, 0.0
    %v405 = vmax.f32 %v401, 0.0
    %407 = vset.pattern.permute.xlu0 0
    %408 = vperm.xlu0 %407, %v371
    %v409 = vpop.permute.xlu0 %408
    %v411 = vmul.f32 %v402, %v409
    %v412 = vmul.f32 %v403, %v409
    %v413 = vmul.f32 %v404, %v409
    %v414 = vmul.f32 %v405, %v409
    %v415 = vadd.f32 %v365, %v411
    %v416 = vadd.f32 %v366, %v412
    %v417 = vadd.f32 %v367, %v413
    %v418 = vadd.f32 %v368, %v414
    %v419 = vrot.slane %v415, 4
    %v420 = vadd.f32 %v415, %v419
    %v421 = vrot.slane %v420, 2
    %v422 = vadd.f32 %v420, %v421
    %v423 = vrot.slane %v422, 1
    %v424 = vadd.f32 %v422, %v423
    %v425 = vrot.slane %v416, 4
    %v426 = vadd.f32 %v416, %v425
    %v427 = vrot.slane %v426, 2
    %v428 = vadd.f32 %v426, %v427
    %v429 = vrot.slane %v428, 1
    %v430 = vadd.f32 %v428, %v429
    %v431 = vrot.slane %v417, 4
    %v432 = vadd.f32 %v417, %v431
    %v433 = vrot.slane %v432, 2
    %v434 = vadd.f32 %v432, %v433
    %v435 = vrot.slane %v434, 1
    %v436 = vadd.f32 %v434, %v435
    %v437 = vrot.slane %v418, 4
    %v438 = vadd.f32 %v418, %v437
    %v439 = vrot.slane %v438, 2
    %v440 = vadd.f32 %v438, %v439
    %v441 = vrot.slane %v440, 1
    %v442 = vadd.f32 %v440, %v441
    %444 = vset.pattern.permute.xlu0 0
    %445 = vperm.xlu0 %444, %v23
    %v446 = vpop.permute.xlu0 %445
    %v448 = vlaneseq
    %v449 = vshrl.u32 %v448, 7
    %v450 = vsub.s32 0, %v449
    %v451 = vrot.slane %v446, %v450
    %v452 = vadd.f32 %v424, %v451
    %v453 = vadd.f32 %v430, %v451
    %v454 = vadd.f32 %v436, %v451
    %v455 = vadd.f32 %v442, %v451
    %v460 = vcombine.low %v452, %v453
    %v461 = vcombine.low %v454, %v455
    %v463 = vunpack.c.l.s4 1966171168
    %v464 = vunpack.c.0.s8 %v463
    %v465 = vlaneseq
    %v466 = vshrl.u32 %v465, 7
    %v467 = vsub.s32 %v464, %v466
    %v468 = vrot.slane %v460, %v467
    %v470 = vunpack.c.l.s4 1966171168
    %v471 = vunpack.c.0.s8 %v470
    %v472 = vlaneseq
    %v473 = vshrl.u32 %v472, 7
    %v474 = vsub.s32 %v471, %v473
    %v475 = vrot.slane %v461, %v474
    %v476 = vcombine.low %v468, %v475
    %v478 = vunpack.c.l.s4 1966171168
    %v479 = vunpack.c.0.s8 %v478
    %v480 = vlaneseq
    %v481 = vshrl.u32 %v480, 7
    %v482 = vsub.s32 %v479, %v481
    %v483 = vrot.slane %v476, %v482
    %v485 = vlaneseq
    %vm486 = vcmp.ge.s32.totalorder %v485, 0
    %vm487 = vcmp.lt.s32.totalorder %v485, 512
    %vm488 = vmand %vm486, %vm487
    %489 = vst.msk [vmem:[#allocation3] sm:$0xf] %vm488, %v483
    // Predicated region
    $region22: #{tpu_custom_call.1} parent=1 // pred_check
      _
    $region23: #{tpu_custom_call.1} parent=1 // pred_check_branch
      %491 = sbr.rel (0) target = $region25
    $region24: #{tpu_custom_call.1} parent=1 // pred_region
      %s493 = ssub.s32 64, 64
      %494 = vsyncadd [#allocation4], %s493
      %s496 = sshll.u32 [#allocation3], 4
      %s497 = int_to_ptr.vmem [resolvable:$true] %s496
      %499 = dma.vmem_to_hbm [thread:$0]  %s497, 64, %s5, [#allocation4]
    $region25: #{tpu_custom_call.1} parent=1 // pred_fallthru
      _
    // Predicated region
    $region26: #{tpu_custom_call.1} parent=1 // pred_check
      _
    $region27: #{tpu_custom_call.1} parent=1 // pred_check_branch
      %501 = sbr.rel (0) target = $region29
    $region28: #{tpu_custom_call.1} parent=1 // pred_region
      %502 = dma.done [#allocation4], 64
    $region29: #{tpu_custom_call.1} parent=1 // pred_fallthru
      _
    %503 = vsyncpa [#allocation4], 1

</llo_original>
